<compile_context>
chip_gen: v7x
topology: tpu7x:2x2x1
jax: 0.10.0
libtpu: 0.0.40
codegen_flags: <defaults>
</compile_context>

<pallas_src>
import functools

import jax
import jax.numpy as jnp
from jax import lax
from jax.experimental import pallas as pl
from jax.experimental.pallas import tpu as pltpu


def _round_up(x, m):
    return (x + m - 1) // m * m


# ----------------------------- Pallas kernel ------------------------------

def _proj_ln_kernel(x_ref, w_ref, p_ref, o_ref, *, eps, d_real):
    # x_ref: (TM, Pp) bf16   w_ref: (Pp, Dp) bf16
    # p_ref: (3, Dp)  f32    rows = [conv bias, ln gamma, ln beta] (zero-padded cols)
    # o_ref: (TM, Dp) f32
    y = jnp.dot(x_ref[...], w_ref[...], preferred_element_type=jnp.float32)
    y = y + p_ref[0:1, :]                      # conv bias; padded cols stay exactly 0
    # LayerNorm over the real embed dim (one-pass stats; padded cols contribute 0).
    inv_d = 1.0 / d_real
    mean = jnp.sum(y, axis=-1, keepdims=True) * inv_d
    var = jnp.sum(y * y, axis=-1, keepdims=True) * inv_d - mean * mean
    var = jnp.maximum(var, 0.0)
    y_hat = (y - mean) * lax.rsqrt(var + eps)
    o_ref[...] = (y_hat * p_ref[1:2, :] + p_ref[2:3, :]).astype(o_ref.dtype)


def _pick_tm(M, Pp, Dp, in_bytes, out_bytes=4, budget=40 * 1024 * 1024):
    """Largest power-of-two row tile that fits the VMEM budget (double-buffered
    x tile + output tile, resident weight + params), then shrink until the grid
    has >= 2 steps so both v7x TensorCores are fed."""
    fixed = 2 * Pp * Dp * in_bytes + 2 * 3 * Dp * 4
    tm = 1024
    while tm > 8:
        per_step = 2 * tm * Pp * in_bytes + 2 * tm * Dp * out_bytes
        if fixed + per_step <= budget:
            break
        tm //= 2
    while tm > 8 and _round_up(M, tm) // tm < 2:
        tm //= 2
    return max(tm, 8)


def _proj_layernorm(patches, w, params, d_real, *, eps=1e-5):
    """patches: (M, Pp) bf16, w: (Pp, Dp) bf16, params: (3, Dp) f32 -> (M, Dp) f32."""
    M, Pp = patches.shape
    _, Dp = w.shape
    tm = _pick_tm(M, Pp, Dp, patches.dtype.itemsize)
    Mp = _round_up(M, tm)
    if Mp != M:
        patches = jnp.pad(patches, ((0, Mp - M), (0, 0)))

    kernel = functools.partial(_proj_ln_kernel, eps=eps, d_real=float(d_real))
    out = pl.pallas_call(
        kernel,
        out_shape=jax.ShapeDtypeStruct((Mp, Dp), jnp.float32),
        grid_spec=pltpu.PrefetchScalarGridSpec(
            num_scalar_prefetch=0,
            grid=(Mp // tm,),
            in_specs=[
                pl.BlockSpec((tm, Pp), lambda i: (i, 0)),
                pl.BlockSpec((Pp, Dp), lambda i: (0, 0)),   # resident weight
                pl.BlockSpec((3, Dp), lambda i: (0, 0)),    # resident bias/gamma/beta
            ],
            out_specs=pl.BlockSpec((tm, Dp), lambda i: (i, 0)),
        ),
        compiler_params=pltpu.CompilerParams(
            dimension_semantics=("parallel",),
            vmem_limit_bytes=48 * 1024 * 1024,
        ),
    )(patches, w, params)
    return out[:M]


# ------------------------------- JAX glue ---------------------------------

def _im2col(x, kh, kw, stride, pad_h, pad_w):
    """x: (B, C, H, W) NCHW -> (B*Ho*Wo, C*kh*kw); channel slowest / kw fastest,
    matching PyTorch Conv2d weight.reshape(out, -1) ordering."""
    B, C, H, W = x.shape
    xp = jnp.pad(x, ((0, 0), (0, 0), (pad_h, pad_h), (pad_w, pad_w)))
    Ho = (H + 2 * pad_h - kh) // stride + 1
    Wo = (W + 2 * pad_w - kw) // stride + 1
    cols = []
    for ki in range(kh):
        for kj in range(kw):
            cols.append(xp[:, :, ki:ki + stride * Ho:stride,
                           kj:kj + stride * Wo:stride])        # (B, C, Ho, Wo)
    pat = jnp.stack(cols, axis=0)                              # (kh*kw, B, C, Ho, Wo)
    pat = jnp.transpose(pat, (1, 3, 4, 2, 0))                  # (B, Ho, Wo, C, kh*kw)
    pat = pat.reshape(B * Ho * Wo, C * kh * kw)
    return pat, Ho, Wo


def overlap_patch_embed(x, conv_w, conv_b, ln_gamma, ln_beta, *, stride,
                        compute_dtype=jnp.bfloat16, eps=1e-5):
    """Forward of OverlapPatchEmbed. x: (B, Cin, H, W) NCHW.
    conv_w: (D, Cin, KH, KW), conv_b/ln_gamma/ln_beta: (D,).
    Returns (out (B, Ho*Wo, D) f32, Ho, Wo)."""
    D, Cin, KH, KW = conv_w.shape
    B = x.shape[0]
    patches, Ho, Wo = _im2col(x, KH, KW, stride, KH // 2, KW // 2)

    P = Cin * KH * KW
    Pp = _round_up(P, 128)
    Dp = _round_up(D, 128)

    patches = jnp.pad(patches.astype(compute_dtype), ((0, 0), (0, Pp - P)))
    w_flat = conv_w.reshape(D, P).T.astype(compute_dtype)              # (P, D)
    w_flat = jnp.pad(w_flat, ((0, Pp - P), (0, Dp - D)))
    params = jnp.pad(
        jnp.stack([conv_b, ln_gamma, ln_beta]).astype(jnp.float32),
        ((0, 0), (0, Dp - D)))                                         # (3, Dp)

    out = _proj_layernorm(patches, w_flat, params, D, eps=eps)         # (M, Dp) f32
    out = out[:, :D].reshape(B, Ho * Wo, D)
    return out, Ho, Wo


# ----------------------------- reference (JAX) -----------------------------

def _reference(x, conv_w, conv_b, ln_gamma, ln_beta, *, stride, eps=1e-5):
    KH, KW = conv_w.shape[2], conv_w.shape[3]
    y = lax.conv_general_dilated(
        x, conv_w, window_strides=(stride, stride),
        padding=((KH // 2, KH // 2), (KW // 2, KW // 2)),
        dimension_numbers=("NCHW", "OIHW", "NCHW"),
        precision=lax.Precision.HIGHEST)
    y = y + conv_b[None, :, None, None]
    B, D, Ho, Wo = y.shape
    y = y.reshape(B, D, Ho * Wo).transpose(0, 2, 1)                    # (B, N, D)
    mean = jnp.mean(y, axis=-1, keepdims=True)
    var = jnp.mean(jnp.square(y - mean), axis=-1, keepdims=True)
    y = (y - mean) * lax.rsqrt(var + eps)
    return y * ln_gamma + ln_beta, Ho, Wo


# --------------------------------- main ------------------------------------

if __name__ == "__main__":
    # Small config consistent with the module: img 16x16, patch 3, stride 2.
    B, Cin, H, W = 2, 4, 16, 16
    embed_dim, patch_size, stride = 32, 3, 2

    key = jax.random.PRNGKey(0)
    k1, k2, k3, k4, k5 = jax.random.split(key, 5)
    x = jax.random.normal(k1, (B, Cin, H, W), jnp.float32)
    conv_w = jax.random.normal(k2, (embed_dim, Cin, patch_size, patch_size),
                               jnp.float32) * 0.1
    conv_b = jax.random.normal(k3, (embed_dim,), jnp.float32) * 0.1
    ln_gamma = 1.0 + 0.05 * jax.random.normal(k4, (embed_dim,), jnp.float32)
    ln_beta = 0.05 * jax.random.normal(k5, (embed_dim,), jnp.float32)

    out, h, w = overlap_patch_embed(x, conv_w, conv_b, ln_gamma, ln_beta,
                                    stride=stride)
    out = jax.block_until_ready(out)

    # Reference consumes the same bf16-quantized x / conv_w the kernel sees,
    # but computes in full f32, so the comparison isolates kernel correctness.
    x_q = x.astype(jnp.bfloat16).astype(jnp.float32)
    w_q = conv_w.astype(jnp.bfloat16).astype(jnp.float32)
    ref, rh, rw = _reference(x_q, w_q, conv_b, ln_gamma, ln_beta, stride=stride)

    assert (h, w) == (rh, rw) == (8, 8)
    assert out.shape == (B, h * w, embed_dim)
    err = float(jnp.max(jnp.abs(out - ref)))
    assert err < 1e-3, f"max abs err {err}"

    print("KERNEL_OK")
</pallas_src>

<mosaic_0001>
module attributes {stable_mosaic.version = 11 : i64} {
  func.func @_proj_ln_kernel(%arg0: i32, %arg1: memref<64x128xbf16, #tpu.memory_space<vmem>>, %arg2: memref<128x128xbf16, #tpu.memory_space<vmem>>, %arg3: memref<3x128xf32, #tpu.memory_space<vmem>>, %arg4: memref<64x128xf32, #tpu.memory_space<vmem>>) attributes {dimension_semantics = [#tpu.dimension_semantics<parallel>], iteration_bounds = array<i64: 2>, scalar_prefetch = 0 : i64, scratch_operands = 0 : i64, tpu.core_type = #tpu.core_type<tc>, window_params = [{transform_indices = @transform_0, window_bounds = array<i64: 64, 128>}, {pipeline_mode = #tpu.pipeline_mode<synchronous>, transform_indices = @transform_1, window_bounds = array<i64: 128, 128>}, {pipeline_mode = #tpu.pipeline_mode<synchronous>, transform_indices = @transform_2, window_bounds = array<i64: 3, 128>}, {transform_indices = @transform_3, window_bounds = array<i64: 64, 128>}]} {
    %c0 = arith.constant 0 : index
    %c0_0 = arith.constant 0 : index
    %0 = vector.load %arg1[%c0, %c0_0] : memref<64x128xbf16, #tpu.memory_space<vmem>>, vector<64x128xbf16>
    %c0_1 = arith.constant 0 : index
    %c0_2 = arith.constant 0 : index
    %1 = vector.load %arg2[%c0_1, %c0_2] : memref<128x128xbf16, #tpu.memory_space<vmem>>, vector<128x128xbf16>
    %cst = arith.constant dense<0.000000e+00> : vector<64x128xf32>
    %2 = tpu.matmul %0, %1, %cst {dimension_numbers = #tpu.dot_dimension_numbers<[1], [0], [0], [1], [0, 0, 1, 1], [], []>} : vector<64x128xbf16>, vector<128x128xbf16>, vector<64x128xf32> -> vector<64x128xf32>
    %c0_3 = arith.constant 0 : index
    %c0_4 = arith.constant 0 : index
    %3 = vector.load %arg3[%c0_3, %c0_4] : memref<3x128xf32, #tpu.memory_space<vmem>>, vector<1x128xf32>
    %4 = vector.broadcast %3 : vector<1x128xf32> to vector<64x128xf32>
    %5 = arith.addf %2, %4 : vector<64x128xf32>
    %cst_5 = arith.constant dense<0.000000e+00> : vector<64xf32>
    %6 = vector.multi_reduction <add>, %5, %cst_5 [1] : vector<64x128xf32> to vector<64xf32>
    %7 = vector.shape_cast %6 : vector<64xf32> to vector<64x1xf32>
    %cst_6 = arith.constant 3.125000e-02 : f32
    %8 = vector.broadcast %cst_6 : f32 to vector<64x1xf32>
    %9 = arith.mulf %7, %8 : vector<64x1xf32>
    %10 = arith.mulf %5, %5 : vector<64x128xf32>
    %cst_7 = arith.constant dense<0.000000e+00> : vector<64xf32>
    %11 = vector.multi_reduction <add>, %10, %cst_7 [1] : vector<64x128xf32> to vector<64xf32>
    %12 = vector.shape_cast %11 : vector<64xf32> to vector<64x1xf32>
    %cst_8 = arith.constant 3.125000e-02 : f32
    %13 = vector.broadcast %cst_8 : f32 to vector<64x1xf32>
    %14 = arith.mulf %12, %13 : vector<64x1xf32>
    %15 = arith.mulf %9, %9 : vector<64x1xf32>
    %16 = arith.subf %14, %15 : vector<64x1xf32>
    %cst_9 = arith.constant 0.000000e+00 : f32
    %17 = vector.broadcast %cst_9 : f32 to vector<64x1xf32>
    %18 = arith.maximumf %16, %17 : vector<64x1xf32>
    %19 = vector.broadcast %9 : vector<64x1xf32> to vector<64x128xf32>
    %20 = arith.subf %5, %19 : vector<64x128xf32>
    %cst_10 = arith.constant 9.99999974E-6 : f32
    %21 = vector.broadcast %cst_10 : f32 to vector<64x1xf32>
    %22 = arith.addf %18, %21 : vector<64x1xf32>
    %23 = math.rsqrt %22 : vector<64x1xf32>
    %24 = vector.broadcast %23 : vector<64x1xf32> to vector<64x128xf32>
    %25 = arith.mulf %20, %24 : vector<64x128xf32>
    %c1 = arith.constant 1 : index
    %c0_11 = arith.constant 0 : index
    %26 = vector.load %arg3[%c1, %c0_11] : memref<3x128xf32, #tpu.memory_space<vmem>>, vector<1x128xf32>
    %27 = vector.broadcast %26 : vector<1x128xf32> to vector<64x128xf32>
    %28 = arith.mulf %25, %27 : vector<64x128xf32>
    %c2 = arith.constant 2 : index
    %c0_12 = arith.constant 0 : index
    %29 = vector.load %arg3[%c2, %c0_12] : memref<3x128xf32, #tpu.memory_space<vmem>>, vector<1x128xf32>
    %30 = vector.broadcast %29 : vector<1x128xf32> to vector<64x128xf32>
    %31 = arith.addf %28, %30 : vector<64x128xf32>
    %c0_13 = arith.constant 0 : index
    %c0_14 = arith.constant 0 : index
    %32 = vector.load %arg4[%c0_13, %c0_14] : memref<64x128xf32, #tpu.memory_space<vmem>>, vector<64x128xf32>
    tpu.vector_store %arg4[%c0_13, %c0_14], %31 {strides = array<i32>} : memref<64x128xf32, #tpu.memory_space<vmem>>, vector<64x128xf32>,
    return
  }
  func.func @transform_0(%arg0: i32) -> (i32, i32) {
    %c0_i32 = arith.constant 0 : i32
    %c0_i32_0 = arith.constant 0 : i32
    return %arg0, %c0_i32 : i32, i32
  }
  func.func @transform_1(%arg0: i32) -> (i32, i32) {
    %c0_i32 = arith.constant 0 : i32
    %c0_i32_0 = arith.constant 0 : i32
    %c0_i32_1 = arith.constant 0 : i32
    return %c0_i32, %c0_i32_0 : i32, i32
  }
  func.func @transform_2(%arg0: i32) -> (i32, i32) {
    %c0_i32 = arith.constant 0 : i32
    %c0_i32_0 = arith.constant 0 : i32
    %c0_i32_1 = arith.constant 0 : i32
    return %c0_i32, %c0_i32_0 : i32, i32
  }
  func.func @transform_3(%arg0: i32) -> (i32, i32) {
    %c0_i32 = arith.constant 0 : i32
    %c0_i32_0 = arith.constant 0 : i32
    return %arg0, %c0_i32 : i32, i32
  }
}

</mosaic_0001>

<llo_original>
// kernel: tpu_custom_call.1
$region0: #{tpu_custom_call.1}
  #allocation0 [shape = 'u32[]', space=smem, size = 0x4, offset = 0x4, fixed_abs, tag = 'smem constant byte address 0x4 - core index']
  #allocation1 [shape = 'u32[144,128]{1,0:T(1,128)}', space=vmem, size = 0x12000, scoped, tag = 'internal scratch']
  %s0 = inlined_call_operand.hbm [shape: bf16[128,128], index: 0, kind: input, shape index: {}]
  %s1 = inlined_call_operand.hbm [shape: bf16[128,128], index: 1, kind: input, shape index: {}]
  %s2 = inlined_call_operand.vmem [shape: f32[3,128], index: 2, kind: input, shape index: {}]
  %s3 = inlined_call_operand.hbm [shape: f32[128,128], index: 3, kind: output, shape index: {}]
  %s4 = sld [smem:[#allocation0]]
  $region53: #{tpu_custom_call.1} parent=0
    _
  %s6 = ssub.s32 1, %s4
  %s7 = scalar_select 0, %s6, %s4
  $region1: #{tpu_custom_call.1} parent=0
    #allocation2 [shape = 'u8[32768]{0}', space=vmem, size = 0x8000, scoped, tag = 'input window, operand 0']
    #allocation3 [shape = 's32[2]{0}', space=sflag, size = 0x8, scoped, tag = 'scoped memory for tpu_custom_call.1']
    #allocation4 [shape = 's32[2]{0}', space=sflag, size = 0x8, scoped, tag = 'scoped memory for tpu_custom_call.1']
    #allocation5 [shape = 'u8[32768]{0}', space=vmem, size = 0x8000, scoped, tag = 'input window, operand 1, single buffered']
    #allocation6 [shape = 's32[1]{0}', space=sflag, size = 0x4, scoped, tag = 'scoped memory for tpu_custom_call.1']
    #allocation7 [shape = 'u8[65536]{0}', space=vmem, size = 0x10000, scoped, tag = 'output window, operand 0']
    %8 = vsyncpa [#allocation3], 0
    %s9 = scalar_lea.sflag [#allocation3], 1
    %10 = vsyncpa %s9, 0
    %11 = vsyncpa [#allocation6], 0
    %12 = vsyncpa [#allocation4], 0
    %s13 = scalar_lea.sflag [#allocation4], 1
    %14 = vsyncpa %s13, 0
    loop: start=0, step=1, limit=4
    $region2: #{tpu_custom_call.1} parent=1 // loop_pre_header
      _
    $region3: #{tpu_custom_call.1} parent=1 // loop_header
      %s16 = sphi 0, %s20
      %p17 = scmp.ge.s32.totalorder %s16, 4
      %s26 = sphi 0, %s28
      %s29 = sphi 0, %s26
      %s30 = sphi 0, %s29
      %s46 = sphi 0, %s30
      %s50 = sphi 0, %s50
      %s52 = sphi 0, %s50
      %s53 = sphi 0, %s52
      %s67 = sphi 0, %s53
      %s71 = sphi 0, %s71
      %s73 = sphi 0, %s71
      %s74 = sphi 0, %s73
      %s88 = sphi 0, %s74
      %s94 = sphi 0, %s96
      %s97 = sphi 0, %s94
      %s98 = sphi 0, %s97
      %s114 = sphi 0, %s98
    $region4: #{tpu_custom_call.1} parent=1 // loop_header_branch
      %19 = sbr.rel (%p17) target = $region8
    $region5: #{tpu_custom_call.1} parent=1 // loop_body
      %s21 = ssub.s32 %s16, 1
      %s22 = ssub.s32 %s16, 2
      %s23 = sadd.s32 %s16, 1
      %s24 = ssub.s32 %s16, %s23
      %p25 = scmp.eq.s32.totalorder %s24, 0
      %s27 = sadd.s32 %s26, 1
      %s28 = scalar_select %p25, %s26, %s27
      %p31 = pneg %p25
      %p32 = scmp.eq.s32.totalorder %s16, 1
      %p33 = por %p31, %p32
      %p34 = scmp.ne.s32.totalorder %s26, %s29
      %p35 = scmp.eq.s32.totalorder %s16, 0
      %p36 = por %p34, %p35
      %p37 = scmp.ne.s32.totalorder %s26, %s29
      %p38 = scmp.eq.s32.totalorder %s21, 1
      %p39 = por %p37, %p38
      %p40 = scmp.ne.s32.totalorder %s29, %s30
      %p41 = scmp.eq.s32.totalorder %s21, 0
      %p42 = por %p40, %p41
      %p43 = scmp.ne.s32.totalorder %s29, %s30
      %p44 = scmp.eq.s32.totalorder %s22, 1
      %p45 = por %p43, %p44
      %p47 = scmp.ne.s32.totalorder %s30, %s46
      %p48 = scmp.eq.s32.totalorder %s22, 0
      %p49 = por %p47, %p48
      %s51 = sadd.s32 %s50, 1
      %p54 = scmp.eq.s32.totalorder %s16, 1
      %p55 = scmp.ne.s32.totalorder %s50, %s52
      %p56 = scmp.eq.s32.totalorder %s16, 0
      %p57 = por %p55, %p56
      %p58 = scmp.ne.s32.totalorder %s50, %s52
      %p59 = scmp.eq.s32.totalorder %s21, 1
      %p60 = por %p58, %p59
      %p61 = scmp.ne.s32.totalorder %s52, %s53
      %p62 = scmp.eq.s32.totalorder %s21, 0
      %p63 = por %p61, %p62
      %p64 = scmp.ne.s32.totalorder %s52, %s53
      %p65 = scmp.eq.s32.totalorder %s22, 1
      %p66 = por %p64, %p65
      %p68 = scmp.ne.s32.totalorder %s53, %s67
      %p69 = scmp.eq.s32.totalorder %s22, 0
      %p70 = por %p68, %p69
      %s72 = sadd.s32 %s71, 1
      %p75 = scmp.eq.s32.totalorder %s16, 1
      %p76 = scmp.ne.s32.totalorder %s71, %s73
      %p77 = scmp.eq.s32.totalorder %s16, 0
      %p78 = por %p76, %p77
      %p79 = scmp.ne.s32.totalorder %s71, %s73
      %p80 = scmp.eq.s32.totalorder %s21, 1
      %p81 = por %p79, %p80
      %p82 = scmp.ne.s32.totalorder %s73, %s74
      %p83 = scmp.eq.s32.totalorder %s21, 0
      %p84 = por %p82, %p83
      %p85 = scmp.ne.s32.totalorder %s73, %s74
      %p86 = scmp.eq.s32.totalorder %s22, 1
      %p87 = por %p85, %p86
      %p89 = scmp.ne.s32.totalorder %s74, %s88
      %p90 = scmp.eq.s32.totalorder %s22, 0
      %p91 = por %p89, %p90
      %s92 = ssub.s32 %s16, %s23
      %p93 = scmp.eq.s32.totalorder %s92, 0
      %s95 = sadd.s32 %s94, 1
      %s96 = scalar_select %p93, %s94, %s95
      %p99 = pneg %p93
      %p100 = scmp.eq.s32.totalorder %s16, 1
      %p101 = por %p99, %p100
      %p102 = scmp.ne.s32.totalorder %s94, %s97
      %p103 = scmp.eq.s32.totalorder %s16, 0
      %p104 = por %p102, %p103
      %p105 = scmp.ne.s32.totalorder %s94, %s97
      %p106 = scmp.eq.s32.totalorder %s21, 1
      %p107 = por %p105, %p106
      %p108 = scmp.ne.s32.totalorder %s97, %s98
      %p109 = scmp.eq.s32.totalorder %s21, 0
      %p110 = por %p108, %p109
      %p111 = scmp.ne.s32.totalorder %s97, %s98
      %p112 = scmp.eq.s32.totalorder %s22, 1
      %p113 = por %p111, %p112
      %p115 = scmp.ne.s32.totalorder %s98, %s114
      %p116 = scmp.eq.s32.totalorder %s22, 0
      %p117 = por %p115, %p116
      %p118 = scmp.le.s32.totalorder 1, %s16
      %p119 = scmp.lt.s32.totalorder %s16, 3
      %p120 = pnand %p118, %p119
      %p121 = pneg %p120
      // Predicated region
      $region9: #{tpu_custom_call.1} parent=5 // pred_check
        _
      $region10: #{tpu_custom_call.1} parent=5 // pred_check_branch
        %123 = sbr.rel (%p120) target = $region12
      $region11: #{tpu_custom_call.1} parent=5 // pred_region
        %s124 = ssub.s32 %s16, 1
        // Predicated region
        $region13: #{tpu_custom_call.1} parent=11 // pred_check
          %p125 = pneg %p63
        $region14: #{tpu_custom_call.1} parent=11 // pred_check_branch
          %127 = sbr.rel (%p125) target = $region16
        $region15: #{tpu_custom_call.1} parent=11 // pred_region
          %s129 = ssub.s32 1024, 1024
          %130 = vsyncadd [#allocation6], %s129
          %s131 = sshll.u32 [#allocation5], 4
          %s132 = int_to_ptr.vmem [resolvable:$true] %s131
          %137 = dma.hbm_to_vmem [thread:$0]  %s1, 1024, %s132, [#allocation6], 64, 64, 4
        $region16: #{tpu_custom_call.1} parent=11 // pred_fallthru
          _
        // Predicated region
        $region17: #{tpu_custom_call.1} parent=11 // pred_check
          %p138 = pneg %p84
        $region18: #{tpu_custom_call.1} parent=11 // pred_check_branch
          %140 = sbr.rel (%p138) target = $region20
        $region19: #{tpu_custom_call.1} parent=11 // pred_region
          _
        $region20: #{tpu_custom_call.1} parent=11 // pred_fallthru
          _
      $region12: #{tpu_custom_call.1} parent=5 // pred_fallthru
        _
      %p141 = scmp.lt.s32.totalorder %s16, 2
      // Predicated region
      $region21: #{tpu_custom_call.1} parent=5 // pred_check
        %p142 = pneg %p141
      $region22: #{tpu_custom_call.1} parent=5 // pred_check_branch
        %144 = sbr.rel (%p142) target = $region24
      $region23: #{tpu_custom_call.1} parent=5 // pred_region
        // Predicated region
        $region25: #{tpu_custom_call.1} parent=23 // pred_check
          %p145 = pneg %p36
        $region26: #{tpu_custom_call.1} parent=23 // pred_check_branch
          %147 = sbr.rel (%p145) target = $region28
        $region27: #{tpu_custom_call.1} parent=23 // pred_region
          %s148 = sand.u32 %s26, 1
          %s149 = scalar_lea.sflag [#allocation3], %s148
          %s150 = sand.u32 %s26, 1
          %s151 = smul.addr %s150, 32
          %s152 = scalar_lea.vmem [#allocation2], %s151
          %s153 = smul.u32 8, %s16
          %s155 = ssub.s32 512, 512
          %156 = vsyncadd %s149, %s155
          %s157 = smul.addr %s153, 64
          %s158 = scalar_lea.hbm %s0, %s157
          %s159 = sshll.u32 %s152, 4
          %s160 = int_to_ptr.vmem [resolvable:$true] %s159
          %165 = dma.hbm_to_vmem [thread:$0]  %s158, 512, %s160, %s149, 64, 64, 4
        $region28: #{tpu_custom_call.1} parent=23 // pred_fallthru
          _
      $region24: #{tpu_custom_call.1} parent=5 // pred_fallthru
        _
      %p166 = scmp.le.s32.totalorder 1, %s16
      %p167 = scmp.lt.s32.totalorder %s16, 3
      %p168 = pnand %p166, %p167
      %p169 = pneg %p168
      // Predicated region
      $region29: #{tpu_custom_call.1} parent=5 // pred_check
        _
      $region30: #{tpu_custom_call.1} parent=5 // pred_check_branch
        %171 = sbr.rel (%p168) target = $region32
      $region31: #{tpu_custom_call.1} parent=5 // pred_region
        %s172 = ssub.s32 %s16, 1
        %s173 = sand.u32 %s29, 1
        %s174 = scalar_lea.sflag [#allocation3], %s173
        %s175 = sand.u32 %s29, 1
        %s176 = smul.addr %s175, 32
        %s177 = scalar_lea.vmem [#allocation2], %s176
        // Predicated region
        $region33: #{tpu_custom_call.1} parent=31 // pred_check
          %p178 = pneg %p42
        $region34: #{tpu_custom_call.1} parent=31 // pred_check_branch
          %180 = sbr.rel (%p178) target = $region36
        $region35: #{tpu_custom_call.1} parent=31 // pred_region
          %181 = dma.done %s174, 512
        $region36: #{tpu_custom_call.1} parent=31 // pred_fallthru
          _
        // Predicated region
        $region37: #{tpu_custom_call.1} parent=31 // pred_check
          %p182 = pneg %p63
        $region38: #{tpu_custom_call.1} parent=31 // pred_check_branch
          %184 = sbr.rel (%p182) target = $region40
        $region39: #{tpu_custom_call.1} parent=31 // pred_region
          %185 = dma.done [#allocation6], 1024
        $region40: #{tpu_custom_call.1} parent=31 // pred_fallthru
          _
        %s186 = sand.u32 %s29, 1
        %s187 = scalar_lea.sflag [#allocation3], %s186
        %s188 = sand.u32 %s29, 1
        %s189 = smul.addr %s188, 32
        %s190 = scalar_lea.vmem [#allocation2], %s189
        %p191 = pneg %p42
        %p192 = pneg %p39
        %p193 = pneg %p63
        %p194 = pneg %p60
        %p195 = pneg %p84
        %p196 = pneg %p81
        %p197 = pneg %p110
        %p198 = pneg %p107
        %s199 = sand.u32 %s97, 1
        %s200 = scalar_lea.sflag [#allocation4], %s199
        %s201 = sand.u32 %s97, 1
        %s202 = smul.addr %s201, 64
        %s203 = scalar_lea.vmem [#allocation7], %s202
        %s204 = smul.u32 8, %s21
        %s205 = smul.u32 8, %s21
        %v207 = vld [vmem:[%s177] sm:$0xf]
        %v208 = vld [vmem:[%s177 + $0x4] sm:$0xf]
        %v209 = vld [vmem:[%s177 + $0x8] sm:$0xf]
        %v210 = vld [vmem:[%s177 + $0xc] sm:$0xf]
        %v211 = vld [vmem:[%s177 + $0x10] sm:$0xf]
        %v212 = vld [vmem:[%s177 + $0x14] sm:$0xf]
        %v213 = vld [vmem:[%s177 + $0x18] sm:$0xf]
        %v214 = vld [vmem:[%s177 + $0x1c] sm:$0xf]
        %v215 = vld [vmem:[#allocation5] sm:$0xf]
        %v216 = vld [vmem:[#allocation5 + $0x4] sm:$0xf]
        %v217 = vld [vmem:[#allocation5 + $0x8] sm:$0xf]
        %v218 = vld [vmem:[#allocation5 + $0xc] sm:$0xf]
        %v219 = vld [vmem:[#allocation5 + $0x10] sm:$0xf]
        %v220 = vld [vmem:[#allocation5 + $0x14] sm:$0xf]
        %v221 = vld [vmem:[#allocation5 + $0x18] sm:$0xf]
        %v222 = vld [vmem:[#allocation5 + $0x1c] sm:$0xf]
        %v223 = vld [vmem:[#allocation5 + $0x20] sm:$0xf]
        %v224 = vld [vmem:[#allocation5 + $0x24] sm:$0xf]
        %v225 = vld [vmem:[#allocation5 + $0x28] sm:$0xf]
        %v226 = vld [vmem:[#allocation5 + $0x2c] sm:$0xf]
        %v227 = vld [vmem:[#allocation5 + $0x30] sm:$0xf]
        %v228 = vld [vmem:[#allocation5 + $0x34] sm:$0xf]
        %v229 = vld [vmem:[#allocation5 + $0x38] sm:$0xf]
        %v230 = vld [vmem:[#allocation5 + $0x3c] sm:$0xf]
        %v231 = vld [vmem:[%s2] sm:$0x1]
        %v232 = vlaneseq
        %v233 = vshrl.u32 %v232, 7
        %v234 = vsub.s32 0, %v233
        %v235 = vrot.slane %v231, %v234
        %v244 = vunpack.c.l.b16 %v207
        %v245 = vunpack.c.l.b16 %v208
        %v246 = vunpack.c.l.b16 %v209
        %v247 = vunpack.c.l.b16 %v210
        %v248 = vunpack.c.l.b16 %v211
        %v249 = vunpack.c.l.b16 %v212
        %v250 = vunpack.c.l.b16 %v213
        %v251 = vunpack.c.l.b16 %v214
        %v252 = vpack.c.b16 %v245, %v244
        %v253 = vpack.c.b16 %v247, %v246
        %v254 = vpack.c.b16 %v249, %v248
        %v255 = vpack.c.b16 %v251, %v250
        %v276 = vunpack.c.l.b16 %v215
        %v277 = vunpack.c.l.b16 %v216
        %v278 = vunpack.c.l.b16 %v217
        %v279 = vunpack.c.l.b16 %v218
        %v280 = vunpack.c.l.b16 %v219
        %v281 = vunpack.c.l.b16 %v220
        %v282 = vunpack.c.l.b16 %v221
        %v283 = vunpack.c.l.b16 %v222
        %v284 = vunpack.c.l.b16 %v223
        %v285 = vunpack.c.l.b16 %v224
        %v286 = vunpack.c.l.b16 %v225
        %v287 = vunpack.c.l.b16 %v226
        %v288 = vunpack.c.l.b16 %v227
        %v289 = vunpack.c.l.b16 %v228
        %v290 = vunpack.c.l.b16 %v229
        %v291 = vunpack.c.l.b16 %v230
        %v292 = vpack.c.b16 %v277, %v276
        %v293 = vpack.c.b16 %v279, %v278
        %v294 = vpack.c.b16 %v281, %v280
        %v295 = vpack.c.b16 %v283, %v282
        %v296 = vpack.c.b16 %v285, %v284
        %v297 = vpack.c.b16 %v287, %v286
        %v298 = vpack.c.b16 %v289, %v288
        %v299 = vpack.c.b16 %v291, %v290
        %308 = vmatprep.subr.bf16.mxu0 0
        %309 = vmatpush1.bf16.msra.mxu0 %v292
        %310 = vmatprep.subr.bf16.mxu0 0
        %311 = vmatpush1.bf16.msra.mxu0 %v293
        %312 = vmatprep.subr.bf16.mxu0 0
        %313 = vmatpush1.bf16.msra.mxu0 %v294
        %314 = vmatprep.subr.bf16.mxu0 0
        %315 = vmatpush1.bf16.msra.mxu0 %v295
        %316 = vmatprep.subr.bf16.mxu0 0
        %317 = vmatpush1.bf16.msra.mxu0 %v296
        %318 = vmatprep.subr.bf16.mxu0 0
        %319 = vmatpush1.bf16.msra.mxu0 %v297
        %320 = vmatprep.subr.bf16.mxu0 0
        %321 = vmatpush1.bf16.msra.mxu0 %v298
        %322 = vmatprep.subr.bf16.mxu0 0
        %323 = vmatpush1.bf16.msra.mxu0 %v299
        %324 = vmatprep.subr.bf16.mxu0 0
        %325 = vmatpush1.bf16.msra.mxu0 0
        %326 = vmatprep.subr.bf16.mxu0 0
        %327 = vmatpush1.bf16.msra.mxu0 0
        %328 = vmatprep.subr.bf16.mxu0 0
        %329 = vmatpush1.bf16.msra.mxu0 0
        %330 = vmatprep.subr.bf16.mxu0 0
        %331 = vmatpush1.bf16.msra.mxu0 0
        %332 = vmatprep.subr.bf16.mxu0 0
        %333 = vmatpush1.bf16.msra.mxu0 0
        %334 = vmatprep.subr.bf16.mxu0 0
        %335 = vmatpush1.bf16.msra.mxu0 0
        %336 = vmatprep.subr.bf16.mxu0 0
        %337 = vmatpush1.bf16.msra.mxu0 0
        %338 = vmatprep.subr.bf16.mxu0 0
        %339 = vmatpush1.bf16.msra.mxu0 0
        %340 = vmatprep.mubr.bf16.mxu0 0
        %341 = vmatmul.mubr.bf16.gmra.mrb[0].mxu0 %v252
        %v342 = vpop.f32.mrb[0].mxu0
        %v343 = vadd.f32 %v235, %v342
        %v344 = vpop.f32.mrb[0].mxu0
        %v345 = vpop.f32.mrb[0].mxu0
        %v346 = vadd.f32 %v235, %v345
        %v347 = vpop.f32.mrb[0].mxu0
        %348 = vmatprep.mubr.bf16.mxu0 0
        %349 = vmatmul.mubr.bf16.gmra.mrb[0].mxu0 %v253
        %v350 = vpop.f32.mrb[0].mxu0
        %v351 = vadd.f32 %v235, %v350
        %v352 = vpop.f32.mrb[0].mxu0
        %v353 = vpop.f32.mrb[0].mxu0
        %v354 = vadd.f32 %v235, %v353
        %v355 = vpop.f32.mrb[0].mxu0
        %356 = vmatprep.mubr.bf16.mxu0 0
        %357 = vmatmul.mubr.bf16.gmra.mrb[0].mxu0 %v254
        %v358 = vpop.f32.mrb[0].mxu0
        %v359 = vadd.f32 %v235, %v358
        %v360 = vpop.f32.mrb[0].mxu0
        %v361 = vpop.f32.mrb[0].mxu0
        %v362 = vadd.f32 %v235, %v361
        %v363 = vpop.f32.mrb[0].mxu0
        %364 = vmatprep.mubr.bf16.mxu0 0
        %365 = vmatmul.mubr.bf16.gmra.mrb[0].mxu0 %v255
        %v366 = vpop.f32.mrb[0].mxu0
        %v367 = vadd.f32 %v235, %v366
        %v368 = vpop.f32.mrb[0].mxu0
        %v369 = vpop.f32.mrb[0].mxu0
        %v370 = vadd.f32 %v235, %v369
        %v371 = vpop.f32.mrb[0].mxu0
        %372 = vdwg.mxu0
        %373 = vadd.xlane.f32.xlu0 %v343
        %v374 = vpop.xlane.xlu0 %373
        %375 = vadd.xlane.f32.xlu0 %v346
        %v376 = vpop.xlane.xlu0 %375
        %377 = vadd.xlane.f32.xlu0 %v351
        %v378 = vpop.xlane.xlu0 %377
        %379 = vadd.xlane.f32.xlu0 %v354
        %v380 = vpop.xlane.xlu0 %379
        %381 = vadd.xlane.f32.xlu0 %v359
        %v382 = vpop.xlane.xlu0 %381
        %383 = vadd.xlane.f32.xlu0 %v362
        %v384 = vpop.xlane.xlu0 %383
        %385 = vadd.xlane.f32.xlu0 %v367
        %v386 = vpop.xlane.xlu0 %385
        %387 = vadd.xlane.f32.xlu0 %v370
        %v388 = vpop.xlane.xlu0 %387
        %v389 = vmul.f32 %v374, 0.03125
        %v390 = vmul.f32 %v376, 0.03125
        %v391 = vmul.f32 %v378, 0.03125
        %v392 = vmul.f32 %v380, 0.03125
        %v393 = vmul.f32 %v382, 0.03125
        %v394 = vmul.f32 %v384, 0.03125
        %v395 = vmul.f32 %v386, 0.03125
        %v396 = vmul.f32 %v388, 0.03125
        %v397 = vmul.f32 %v343, %v343
        %v398 = vmul.f32 %v346, %v346
        %v399 = vmul.f32 %v351, %v351
        %v400 = vmul.f32 %v354, %v354
        %v401 = vmul.f32 %v359, %v359
        %v402 = vmul.f32 %v362, %v362
        %v403 = vmul.f32 %v367, %v367
        %v404 = vmul.f32 %v370, %v370
        %405 = vadd.xlane.f32.xlu0 %v397
        %v406 = vpop.xlane.xlu0 %405
        %407 = vadd.xlane.f32.xlu0 %v398
        %v408 = vpop.xlane.xlu0 %407
        %409 = vadd.xlane.f32.xlu0 %v399
        %v410 = vpop.xlane.xlu0 %409
        %411 = vadd.xlane.f32.xlu0 %v400
        %v412 = vpop.xlane.xlu0 %411
        %413 = vadd.xlane.f32.xlu0 %v401
        %v414 = vpop.xlane.xlu0 %413
        %415 = vadd.xlane.f32.xlu0 %v402
        %v416 = vpop.xlane.xlu0 %415
        %417 = vadd.xlane.f32.xlu0 %v403
        %v418 = vpop.xlane.xlu0 %417
        %419 = vadd.xlane.f32.xlu0 %v404
        %v420 = vpop.xlane.xlu0 %419
        %v421 = vmul.f32 %v406, 0.03125
        %v422 = vmul.f32 %v408, 0.03125
        %v423 = vmul.f32 %v410, 0.03125
        %v424 = vmul.f32 %v412, 0.03125
        %v425 = vmul.f32 %v414, 0.03125
        %v426 = vmul.f32 %v416, 0.03125
        %v427 = vmul.f32 %v418, 0.03125
        %v428 = vmul.f32 %v420, 0.03125
        %v429 = vmul.f32 %v389, %v389
        %v430 = vmul.f32 %v390, %v390
        %v431 = vmul.f32 %v391, %v391
        %v432 = vmul.f32 %v392, %v392
        %v433 = vmul.f32 %v393, %v393
        %v434 = vmul.f32 %v394, %v394
        %v435 = vmul.f32 %v395, %v395
        %v436 = vmul.f32 %v396, %v396
        %v437 = vsub.f32 %v421, %v429
        %v438 = vsub.f32 %v422, %v430
        %v439 = vsub.f32 %v423, %v431
        %v440 = vsub.f32 %v424, %v432
        %v441 = vsub.f32 %v425, %v433
        %v442 = vsub.f32 %v426, %v434
        %v443 = vsub.f32 %v427, %v435
        %v444 = vsub.f32 %v428, %v436
        %v445 = vmax.f32 %v437, 0.0
        %v446 = vmax.f32 %v438, 0.0
        %v447 = vmax.f32 %v439, 0.0
        %v448 = vmax.f32 %v440, 0.0
        %v449 = vmax.f32 %v441, 0.0
        %v450 = vmax.f32 %v442, 0.0
        %v451 = vmax.f32 %v443, 0.0
        %v452 = vmax.f32 %v444, 0.0
        %v453 = vsub.f32 %v343, %v389
        %v454 = vsub.f32 %v346, %v390
        %v455 = vsub.f32 %v351, %v391
        %v456 = vsub.f32 %v354, %v392
        %v457 = vsub.f32 %v359, %v393
        %v458 = vsub.f32 %v362, %v394
        %v459 = vsub.f32 %v367, %v395
        %v460 = vsub.f32 %v370, %v396
        %v461 = vadd.f32 %v445, 1e-05
        %v462 = vadd.f32 %v446, 1e-05
        %v463 = vadd.f32 %v447, 1e-05
        %v464 = vadd.f32 %v448, 1e-05
        %v465 = vadd.f32 %v449, 1e-05
        %v466 = vadd.f32 %v450, 1e-05
        %v467 = vadd.f32 %v451, 1e-05
        %v468 = vadd.f32 %v452, 1e-05
        %v469 = vrsqrt.pop %v461
        %v470 = vrsqrt.pop %v462
        %v471 = vrsqrt.pop %v463
        %v472 = vrsqrt.pop %v464
        %v473 = vrsqrt.pop %v465
        %v474 = vrsqrt.pop %v466
        %v475 = vrsqrt.pop %v467
        %v476 = vrsqrt.pop %v468
        %v477 = vmul.f32 %v453, %v469
        %v478 = vmul.f32 %v454, %v470
        %v479 = vmul.f32 %v455, %v471
        %v480 = vmul.f32 %v456, %v472
        %v481 = vmul.f32 %v457, %v473
        %v482 = vmul.f32 %v458, %v474
        %v483 = vmul.f32 %v459, %v475
        %v484 = vmul.f32 %v460, %v476
        %v485 = vld [vmem:[%s2 + $0x1] sm:$0x1]
        %v486 = vlaneseq
        %v487 = vshrl.u32 %v486, 7
        %v488 = vsub.s32 0, %v487
        %v489 = vrot.slane %v485, %v488
        %v490 = vmul.f32 %v477, %v489
        %v491 = vmul.f32 %v478, %v489
        %v492 = vmul.f32 %v479, %v489
        %v493 = vmul.f32 %v480, %v489
        %v494 = vmul.f32 %v481, %v489
        %v495 = vmul.f32 %v482, %v489
        %v496 = vmul.f32 %v483, %v489
        %v497 = vmul.f32 %v484, %v489
        %v498 = vld [vmem:[%s2 + $0x2] sm:$0x1]
        %v499 = vlaneseq
        %v500 = vshrl.u32 %v499, 7
        %v501 = vsub.s32 0, %v500
        %v502 = vrot.slane %v498, %v501
        %v503 = vadd.f32 %v490, %v502
        %v504 = vadd.f32 %v491, %v502
        %v505 = vadd.f32 %v492, %v502
        %v506 = vadd.f32 %v493, %v502
        %v507 = vadd.f32 %v494, %v502
        %v508 = vadd.f32 %v495, %v502
        %v509 = vadd.f32 %v496, %v502
        %v510 = vadd.f32 %v497, %v502
        %511 = vst [vmem:[%s203] sm:$0xff] %v503
        %512 = vst [vmem:[%s203 + $0x8] sm:$0xff] %v504
        %513 = vst [vmem:[%s203 + $0x10] sm:$0xff] %v505
        %514 = vst [vmem:[%s203 + $0x18] sm:$0xff] %v506
        %515 = vst [vmem:[%s203 + $0x20] sm:$0xff] %v507
        %516 = vst [vmem:[%s203 + $0x28] sm:$0xff] %v508
        %517 = vst [vmem:[%s203 + $0x30] sm:$0xff] %v509
        %518 = vst [vmem:[%s203 + $0x38] sm:$0xff] %v510
        %s519 = sand.u32 %s97, 1
        %s520 = scalar_lea.sflag [#allocation4], %s519
        %s521 = sand.u32 %s97, 1
        %s522 = smul.addr %s521, 64
        %s523 = scalar_lea.vmem [#allocation7], %s522
        // Predicated region
        $region41: #{tpu_custom_call.1} parent=31 // pred_check
          %p524 = pneg %p107
        $region42: #{tpu_custom_call.1} parent=31 // pred_check_branch
          %526 = sbr.rel (%p524) target = $region44
        $region43: #{tpu_custom_call.1} parent=31 // pred_region
          %s527 = smul.u32 8, %s21
          %s529 = ssub.s32 1024, 1024
          %530 = vsyncadd %s520, %s529
          %s531 = smul.addr %s527, 128
          %s532 = scalar_lea.hbm %s3, %s531
          %s533 = sshll.u32 %s523, 4
          %s534 = int_to_ptr.vmem [resolvable:$true] %s533
          %539 = dma.vmem_to_hbm [thread:$0]  %s534, 1024, %s532, %s520, 128, 128, 8
        $region44: #{tpu_custom_call.1} parent=31 // pred_fallthru
          _
      $region32: #{tpu_custom_call.1} parent=5 // pred_fallthru
        _
      %p540 = scmp.le.s32.totalorder 2, %s16
      // Predicated region
      $region45: #{tpu_custom_call.1} parent=5 // pred_check
        %p541 = pneg %p540
      $region46: #{tpu_custom_call.1} parent=5 // pred_check_branch
        %543 = sbr.rel (%p541) target = $region48
      $region47: #{tpu_custom_call.1} parent=5 // pred_region
        %s544 = ssub.s32 %s16, 2
        // Predicated region
        $region49: #{tpu_custom_call.1} parent=47 // pred_check
          %p545 = pneg %p113
        $region50: #{tpu_custom_call.1} parent=47 // pred_check_branch
          %547 = sbr.rel (%p545) target = $region52
        $region51: #{tpu_custom_call.1} parent=47 // pred_region
          %s548 = sand.u32 %s98, 1
          %s549 = scalar_lea.sflag [#allocation4], %s548
          %s550 = sand.u32 %s98, 1
          %s551 = smul.addr %s550, 64
          %s552 = scalar_lea.vmem [#allocation7], %s551
          %553 = dma.done %s549, 1024
        $region52: #{tpu_custom_call.1} parent=47 // pred_fallthru
          _
      $region48: #{tpu_custom_call.1} parent=5 // pred_fallthru
        _
    $region6: #{tpu_custom_call.1} parent=1 // loop_footer
      %s20 = sadd.s32 1, %s16
    $region7: #{tpu_custom_call.1} parent=1 // loop_footer_branch
      %15 = sbr.rel target = $region3
    $region8: #{tpu_custom_call.1} parent=1 // loop_exit
      _
    %554 = vsyncpa [#allocation3], 1
    %s555 = scalar_lea.sflag [#allocation3], 1
    %556 = vsyncpa %s555, 1
    %557 = vsyncpa [#allocation6], 1
    %558 = vsyncpa [#allocation4], 1
    %s559 = scalar_lea.sflag [#allocation4], 1
    %560 = vsyncpa %s559, 1

</llo_original>
